<compile_context>
chip_gen: v6e
topology: v6e:2x2x1
jax: 0.10.0
libtpu: 0.0.40
codegen_flags: <defaults>
</compile_context>

<pallas_src>
import jax
import jax.numpy as jnp
from jax import lax
from jax.experimental import pallas as pl
from jax.experimental.pallas import tpu as pltpu

IN_FEATURES = 128
OUT_FEATURES = 256
_ONE_SIXTH = 1.0 / 6.0
_DEFAULT_TB = 512  # ~2-buffer footprint well under the 32 MiB scoped VMEM on v7x


def _linear_hardswish_kernel(x_ref, w_ref, b_ref, o_ref):
    # x_ref: [TB, IN] bf16, w_ref: [OUT, IN] bf16, b_ref: [1, OUT] f32,
    # o_ref: [TB, OUT] f32
    y = lax.dot_general(
        x_ref[...],
        w_ref[...],
        dimension_numbers=(((1,), (1,)), ((), ())),  # contract over IN on both
        preferred_element_type=jnp.float32,
    )
    y = y + b_ref[...]                        # broadcast bias over batch (f32)
    act = jnp.clip(y + 3.0, 0.0, 6.0)
    o_ref[...] = (y * (act * _ONE_SIXTH)).astype(o_ref.dtype)


def linear_hardswish(x, w, b, *, tb=_DEFAULT_TB):
    """x: [B, IN] f32, w: [OUT, IN] f32 (PyTorch layout), b: [OUT] f32."""
    B, IN = x.shape
    OUT = w.shape[0]

    # If the whole batch fits in one tile, use a block equal to the full array
    # (always a legal block shape); otherwise tile at TB and let Pallas pad
    # the (possibly partial) last block.
    if B <= tb:
        tb = B
    grid = (pl.cdiv(B, tb),)

    x_bf = x.astype(jnp.bfloat16)
    w_bf = w.astype(jnp.bfloat16)
    b2d = b.reshape(1, OUT).astype(jnp.float32)

    return pl.pallas_call(
        _linear_hardswish_kernel,
        out_shape=jax.ShapeDtypeStruct((B, OUT), jnp.float32),
        grid=grid,
        in_specs=[
            pl.BlockSpec((tb, IN), lambda i: (i, 0)),     # x: streamed per tile
            pl.BlockSpec((OUT, IN), lambda i: (0, 0)),    # w: VMEM-resident
            pl.BlockSpec((1, OUT), lambda i: (0, 0)),     # b: VMEM-resident
        ],
        out_specs=pl.BlockSpec((tb, OUT), lambda i: (i, 0)),
        compiler_params=pltpu.CompilerParams(
            dimension_semantics=("parallel",)
        ),
    )(x_bf, w_bf, b2d)


def _reference(x, w, b):
    y = x @ w.T + b
    return y * jnp.clip(y + 3.0, 0.0, 6.0) / 6.0


if __name__ == "__main__":
    key = jax.random.PRNGKey(0)
    kx, kw, kb, kx2 = jax.random.split(key, 4)

    # Deterministic synthetic parameters (shapes from nn.Linear(128, 256)).
    w = jax.random.normal(kw, (OUT_FEATURES, IN_FEATURES), dtype=jnp.float32) * 0.05
    b = jax.random.normal(kb, (OUT_FEATURES,), dtype=jnp.float32) * 0.05

    # Spec shape: x1 = torch.randn(1, 128)
    x = jax.random.normal(kx, (1, IN_FEATURES), dtype=jnp.float32)
    out = linear_hardswish(x, w, b)
    jax.block_until_ready(out)
    assert out.shape == (1, OUT_FEATURES)
    ref = _reference(x, w, b)
    # bf16 matmul inputs with f32 accumulate -> loosened tolerance vs f32 ref.
    assert jnp.allclose(out, ref, atol=5e-2, rtol=5e-2)

    # Exercise the tiled / padded-tail path (B not a multiple of the tile).
    x_big = jax.random.normal(kx2, (640, IN_FEATURES), dtype=jnp.float32)
    out_big = linear_hardswish(x_big, w, b)
    jax.block_until_ready(out_big)
    assert out_big.shape == (640, OUT_FEATURES)
    ref_big = _reference(x_big, w, b)
    assert jnp.allclose(out_big, ref_big, atol=5e-2, rtol=5e-2)

    print("KERNEL_OK")
</pallas_src>

<mosaic_0001>
module attributes {stable_mosaic.version = 11 : i64} {
  func.func @_linear_hardswish_kernel(%arg0: i32, %arg1: memref<1x128xbf16, #tpu.memory_space<vmem>>, %arg2: memref<256x128xbf16, #tpu.memory_space<vmem>>, %arg3: memref<1x256xf32, #tpu.memory_space<vmem>>, %arg4: memref<1x256xf32, #tpu.memory_space<vmem>>) attributes {dimension_semantics = [#tpu.dimension_semantics<parallel>], iteration_bounds = array<i64: 1>, scalar_prefetch = 0 : i64, scratch_operands = 0 : i64, tpu.core_type = #tpu.core_type<tc>, window_params = [{transform_indices = @transform_0, window_bounds = array<i64: 1, 128>}, {pipeline_mode = #tpu.pipeline_mode<synchronous>, transform_indices = @transform_1, window_bounds = array<i64: 256, 128>}, {pipeline_mode = #tpu.pipeline_mode<synchronous>, transform_indices = @transform_2, window_bounds = array<i64: 1, 256>}, {transform_indices = @transform_3, window_bounds = array<i64: 1, 256>}]} {
    %c0 = arith.constant 0 : index
    %c0_0 = arith.constant 0 : index
    %0 = vector.load %arg1[%c0, %c0_0] : memref<1x128xbf16, #tpu.memory_space<vmem>>, vector<1x128xbf16>
    %c0_1 = arith.constant 0 : index
    %c0_2 = arith.constant 0 : index
    %1 = vector.load %arg2[%c0_1, %c0_2] : memref<256x128xbf16, #tpu.memory_space<vmem>>, vector<256x128xbf16>
    %cst = arith.constant dense<0.000000e+00> : vector<1x256xf32>
    %2 = tpu.matmul %0, %1, %cst {dimension_numbers = #tpu.dot_dimension_numbers<[1], [1], [0], [0], [0, 0, 1, 0], [], []>} : vector<1x128xbf16>, vector<256x128xbf16>, vector<1x256xf32> -> vector<1x256xf32>
    %c0_3 = arith.constant 0 : index
    %c0_4 = arith.constant 0 : index
    %3 = vector.load %arg3[%c0_3, %c0_4] : memref<1x256xf32, #tpu.memory_space<vmem>>, vector<1x256xf32>
    %4 = arith.addf %2, %3 : vector<1x256xf32>
    %cst_5 = arith.constant 3.000000e+00 : f32
    %5 = vector.broadcast %cst_5 : f32 to vector<1x256xf32>
    %6 = arith.addf %4, %5 : vector<1x256xf32>
    %cst_6 = arith.constant 0.000000e+00 : f32
    %cst_7 = arith.constant 6.000000e+00 : f32
    %7 = vector.broadcast %cst_6 : f32 to vector<1x256xf32>
    %8 = arith.maximumf %7, %6 : vector<1x256xf32>
    %9 = vector.broadcast %cst_7 : f32 to vector<1x256xf32>
    %10 = arith.minimumf %9, %8 : vector<1x256xf32>
    %cst_8 = arith.constant 0.166666672 : f32
    %11 = vector.broadcast %cst_8 : f32 to vector<1x256xf32>
    %12 = arith.mulf %10, %11 : vector<1x256xf32>
    %13 = arith.mulf %4, %12 : vector<1x256xf32>
    %c0_9 = arith.constant 0 : index
    %c0_10 = arith.constant 0 : index
    %14 = vector.load %arg4[%c0_9, %c0_10] : memref<1x256xf32, #tpu.memory_space<vmem>>, vector<1x256xf32>
    tpu.vector_store %arg4[%c0_9, %c0_10], %13 {strides = array<i32>} : memref<1x256xf32, #tpu.memory_space<vmem>>, vector<1x256xf32>,
    return
  }
  func.func @transform_0(%arg0: i32) -> (i32, i32) {
    %c0_i32 = arith.constant 0 : i32
    %c0_i32_0 = arith.constant 0 : i32
    return %arg0, %c0_i32 : i32, i32
  }
  func.func @transform_1(%arg0: i32) -> (i32, i32) {
    %c0_i32 = arith.constant 0 : i32
    %c0_i32_0 = arith.constant 0 : i32
    %c0_i32_1 = arith.constant 0 : i32
    return %c0_i32, %c0_i32_0 : i32, i32
  }
  func.func @transform_2(%arg0: i32) -> (i32, i32) {
    %c0_i32 = arith.constant 0 : i32
    %c0_i32_0 = arith.constant 0 : i32
    %c0_i32_1 = arith.constant 0 : i32
    return %c0_i32, %c0_i32_0 : i32, i32
  }
  func.func @transform_3(%arg0: i32) -> (i32, i32) {
    %c0_i32 = arith.constant 0 : i32
    %c0_i32_0 = arith.constant 0 : i32
    return %arg0, %c0_i32 : i32, i32
  }
}

</mosaic_0001>

<llo_original>
// kernel: tpu_custom_call.1
$region0: #{tpu_custom_call.1}
  #allocation0 [shape = 'u32[]', space=smem, size = 0x4, offset = 0x4, fixed_abs, tag = 'smem constant byte address 0x4 - core index']
  #allocation1 [shape = 'u32[144,128]{1,0:T(1,128)}', space=vmem, size = 0x12000, scoped, tag = 'internal scratch']
  %s0 = inlined_call_operand.hbm [shape: bf16[1,128], index: 0, kind: input, shape index: {}]
  %s1 = inlined_call_operand.hbm [shape: bf16[256,128], index: 1, kind: input, shape index: {}]
  %s2 = inlined_call_operand.vmem [shape: f32[1,256], index: 2, kind: input, shape index: {}]
  %s3 = inlined_call_operand.hbm [shape: f32[1,256], index: 3, kind: output, shape index: {}]
  %s4 = sld [smem:[#allocation0]]
  $region30: #{tpu_custom_call.1} parent=0
    _
  %s6 = ssub.s32 1, %s4
  %s7 = scalar_select 0, %s6, %s4
  $region1: #{tpu_custom_call.1} parent=0
    #allocation2 [shape = 'u8[512]{0}', space=vmem, size = 0x400, scoped, tag = 'input window, operand 0, single buffered']
    #allocation3 [shape = 's32[1]{0}', space=sflag, size = 0x4, scoped, tag = 'scoped memory for tpu_custom_call.1']
    #allocation4 [shape = 's32[1]{0}', space=sflag, size = 0x4, scoped, tag = 'scoped memory for tpu_custom_call.1']
    #allocation5 [shape = 'u8[65536]{0}', space=vmem, size = 0x10000, scoped, tag = 'input window, operand 1, single buffered']
    #allocation6 [shape = 's32[1]{0}', space=sflag, size = 0x4, scoped, tag = 'scoped memory for tpu_custom_call.1']
    #allocation7 [shape = 'u8[1024]{0}', space=vmem, size = 0x400, scoped, tag = 'output window, operand 0, single buffered']
    %8 = vsyncpa [#allocation3], 0
    %9 = vsyncpa [#allocation6], 0
    %10 = vsyncpa [#allocation4], 0
    // Predicated region
    $region2: #{tpu_custom_call.1} parent=1 // pred_check
      _
    $region3: #{tpu_custom_call.1} parent=1 // pred_check_branch
      %12 = sbr.rel (0) target = $region5
    $region4: #{tpu_custom_call.1} parent=1 // pred_region
      %s14 = ssub.s32 16, 16
      %15 = vsyncadd [#allocation3], %s14
      %s17 = sshll.u32 [#allocation2], 4
      %s18 = int_to_ptr.vmem [resolvable:$true] %s17
      %20 = dma.hbm_to_vmem [thread:$0]  %s0, 16, %s18, [#allocation3]
    $region5: #{tpu_custom_call.1} parent=1 // pred_fallthru
      _
    // Predicated region
    $region6: #{tpu_custom_call.1} parent=1 // pred_check
      _
    $region7: #{tpu_custom_call.1} parent=1 // pred_check_branch
      %22 = sbr.rel (0) target = $region9
    $region8: #{tpu_custom_call.1} parent=1 // pred_region
      %s24 = ssub.s32 2048, 2048
      %25 = vsyncadd [#allocation6], %s24
      %s26 = sshll.u32 [#allocation5], 4
      %s27 = int_to_ptr.vmem [resolvable:$true] %s26
      %32 = dma.hbm_to_vmem [thread:$0]  %s1, 2048, %s27, [#allocation6], 64, 64, 4
    $region9: #{tpu_custom_call.1} parent=1 // pred_fallthru
      _
    // Predicated region
    $region10: #{tpu_custom_call.1} parent=1 // pred_check
      _
    $region11: #{tpu_custom_call.1} parent=1 // pred_check_branch
      %34 = sbr.rel (0) target = $region13
    $region12: #{tpu_custom_call.1} parent=1 // pred_region
      _
    $region13: #{tpu_custom_call.1} parent=1 // pred_fallthru
      _
    // Predicated region
    $region14: #{tpu_custom_call.1} parent=1 // pred_check
      _
    $region15: #{tpu_custom_call.1} parent=1 // pred_check_branch
      %36 = sbr.rel (0) target = $region17
    $region16: #{tpu_custom_call.1} parent=1 // pred_region
      %37 = dma.done [#allocation3], 16
    $region17: #{tpu_custom_call.1} parent=1 // pred_fallthru
      _
    // Predicated region
    $region18: #{tpu_custom_call.1} parent=1 // pred_check
      _
    $region19: #{tpu_custom_call.1} parent=1 // pred_check_branch
      %39 = sbr.rel (0) target = $region21
    $region20: #{tpu_custom_call.1} parent=1 // pred_region
      %40 = dma.done [#allocation6], 2048
    $region21: #{tpu_custom_call.1} parent=1 // pred_fallthru
      _
    %v42 = vld [vmem:[#allocation2] sm:$0x1]
    %v43 = vld [vmem:[#allocation5] sm:$0xf]
    %v44 = vld [vmem:[#allocation5 + $0x4] sm:$0xf]
    %v45 = vld [vmem:[#allocation5 + $0x8] sm:$0xf]
    %v46 = vld [vmem:[#allocation5 + $0xc] sm:$0xf]
    %v47 = vld [vmem:[#allocation5 + $0x10] sm:$0xf]
    %v48 = vld [vmem:[#allocation5 + $0x14] sm:$0xf]
    %v49 = vld [vmem:[#allocation5 + $0x18] sm:$0xf]
    %v50 = vld [vmem:[#allocation5 + $0x1c] sm:$0xf]
    %v51 = vld [vmem:[#allocation5 + $0x20] sm:$0xf]
    %v52 = vld [vmem:[#allocation5 + $0x24] sm:$0xf]
    %v53 = vld [vmem:[#allocation5 + $0x28] sm:$0xf]
    %v54 = vld [vmem:[#allocation5 + $0x2c] sm:$0xf]
    %v55 = vld [vmem:[#allocation5 + $0x30] sm:$0xf]
    %v56 = vld [vmem:[#allocation5 + $0x34] sm:$0xf]
    %v57 = vld [vmem:[#allocation5 + $0x38] sm:$0xf]
    %v58 = vld [vmem:[#allocation5 + $0x3c] sm:$0xf]
    %v59 = vld [vmem:[#allocation5 + $0x40] sm:$0xf]
    %v60 = vld [vmem:[#allocation5 + $0x44] sm:$0xf]
    %v61 = vld [vmem:[#allocation5 + $0x48] sm:$0xf]
    %v62 = vld [vmem:[#allocation5 + $0x4c] sm:$0xf]
    %v63 = vld [vmem:[#allocation5 + $0x50] sm:$0xf]
    %v64 = vld [vmem:[#allocation5 + $0x54] sm:$0xf]
    %v65 = vld [vmem:[#allocation5 + $0x58] sm:$0xf]
    %v66 = vld [vmem:[#allocation5 + $0x5c] sm:$0xf]
    %v67 = vld [vmem:[#allocation5 + $0x60] sm:$0xf]
    %v68 = vld [vmem:[#allocation5 + $0x64] sm:$0xf]
    %v69 = vld [vmem:[#allocation5 + $0x68] sm:$0xf]
    %v70 = vld [vmem:[#allocation5 + $0x6c] sm:$0xf]
    %v71 = vld [vmem:[#allocation5 + $0x70] sm:$0xf]
    %v72 = vld [vmem:[#allocation5 + $0x74] sm:$0xf]
    %v73 = vld [vmem:[#allocation5 + $0x78] sm:$0xf]
    %v74 = vld [vmem:[#allocation5 + $0x7c] sm:$0xf]
    %v75 = vld [vmem:[%s2] sm:$0x3]
    %v108 = vunpack.c.l.b16 %v43
    %v109 = vunpack.c.l.b16 %v44
    %v110 = vunpack.c.l.b16 %v45
    %v111 = vunpack.c.l.b16 %v46
    %v112 = vunpack.c.l.b16 %v47
    %v113 = vunpack.c.l.b16 %v48
    %v114 = vunpack.c.l.b16 %v49
    %v115 = vunpack.c.l.b16 %v50
    %v116 = vunpack.c.l.b16 %v51
    %v117 = vunpack.c.l.b16 %v52
    %v118 = vunpack.c.l.b16 %v53
    %v119 = vunpack.c.l.b16 %v54
    %v120 = vunpack.c.l.b16 %v55
    %v121 = vunpack.c.l.b16 %v56
    %v122 = vunpack.c.l.b16 %v57
    %v123 = vunpack.c.l.b16 %v58
    %v124 = vunpack.c.l.b16 %v59
    %v125 = vunpack.c.l.b16 %v60
    %v126 = vunpack.c.l.b16 %v61
    %v127 = vunpack.c.l.b16 %v62
    %v128 = vunpack.c.l.b16 %v63
    %v129 = vunpack.c.l.b16 %v64
    %v130 = vunpack.c.l.b16 %v65
    %v131 = vunpack.c.l.b16 %v66
    %v132 = vunpack.c.l.b16 %v67
    %v133 = vunpack.c.l.b16 %v68
    %v134 = vunpack.c.l.b16 %v69
    %v135 = vunpack.c.l.b16 %v70
    %v136 = vunpack.c.l.b16 %v71
    %v137 = vunpack.c.l.b16 %v72
    %v138 = vunpack.c.l.b16 %v73
    %v139 = vunpack.c.l.b16 %v74
    %v140 = vpack.c.b16 %v109, %v108
    %v141 = vpack.c.b16 %v111, %v110
    %v142 = vpack.c.b16 %v113, %v112
    %v143 = vpack.c.b16 %v115, %v114
    %v144 = vpack.c.b16 %v117, %v116
    %v145 = vpack.c.b16 %v119, %v118
    %v146 = vpack.c.b16 %v121, %v120
    %v147 = vpack.c.b16 %v123, %v122
    %v148 = vpack.c.b16 %v125, %v124
    %v149 = vpack.c.b16 %v127, %v126
    %v150 = vpack.c.b16 %v129, %v128
    %v151 = vpack.c.b16 %v131, %v130
    %v152 = vpack.c.b16 %v133, %v132
    %v153 = vpack.c.b16 %v135, %v134
    %v154 = vpack.c.b16 %v137, %v136
    %v155 = vpack.c.b16 %v139, %v138
    %v173 = vlaneseq
    %v174 = vshrl.u32 %v173, 7
    %v175 = vsub.s32 0, %v174
    %v176 = vrot.slane %v75, %v175
    %v177 = vlaneseq
    %v178 = vshrl.u32 %v177, 7
    %v179 = vsub.s32 1, %v178
    %v180 = vrot.slane %v75, %v179
    %183 = vmatprep.subr.bf16.mxu0 0
    %184 = vmatpush1.bf16.xpose.msra.mxu0 %v147
    %185 = vmatprep.subr.bf16.mxu0 0
    %186 = vmatpush1.bf16.xpose.msra.mxu0 %v146
    %187 = vmatprep.subr.bf16.mxu0 0
    %188 = vmatpush1.bf16.xpose.msra.mxu0 %v145
    %189 = vmatprep.subr.bf16.mxu0 0
    %190 = vmatpush1.bf16.xpose.msra.mxu0 %v144
    %191 = vmatprep.subr.bf16.mxu0 0
    %192 = vmatpush1.bf16.xpose.msra.mxu0 %v143
    %193 = vmatprep.subr.bf16.mxu0 0
    %194 = vmatpush1.bf16.xpose.msra.mxu0 %v142
    %195 = vmatprep.subr.bf16.mxu0 0
    %196 = vmatpush1.bf16.xpose.msra.mxu0 %v141
    %197 = vmatprep.subr.bf16.mxu0 0
    %198 = vmatpush1.bf16.xpose.msra.mxu0 %v140
    %199 = vmatprep.subr.bf16.mxu0 0
    %200 = vmatpush2.bf16.xpose.msra.mxu0 %v155
    %201 = vmatprep.subr.bf16.mxu0 0
    %202 = vmatpush2.bf16.xpose.msra.mxu0 %v154
    %203 = vmatprep.subr.bf16.mxu0 0
    %204 = vmatpush2.bf16.xpose.msra.mxu0 %v153
    %205 = vmatprep.subr.bf16.mxu0 0
    %206 = vmatpush2.bf16.xpose.msra.mxu0 %v152
    %207 = vmatprep.subr.bf16.mxu0 0
    %208 = vmatpush2.bf16.xpose.msra.mxu0 %v151
    %209 = vmatprep.subr.bf16.mxu0 0
    %210 = vmatpush2.bf16.xpose.msra.mxu0 %v150
    %211 = vmatprep.subr.bf16.mxu0 0
    %212 = vmatpush2.bf16.xpose.msra.mxu0 %v149
    %213 = vmatprep.subr.bf16.mxu0 0
    %214 = vmatpush2.bf16.xpose.msra.mxu0 %v148
    %215 = vmatprep.mubr.bf16.mxu0 0
    %216 = vmatmul.mubr.bf16.gmra.mxu0 %v42
    %v217 = vpop.f32.mrf.mxu0
    %v218 = vadd.f32 %v176, %v217
    %v219 = vpop.f32.mrf.mxu0
    %v220 = vadd.f32 %v180, %v219
    %v221 = vpop.f32.mrf.mxu0
    %v222 = vpop.f32.mrf.mxu0
    %223 = vdwg.mxu0
    %v224 = vadd.f32 %v218, 3.0
    %v225 = vadd.f32 %v220, 3.0
    %v226 = vmax.f32 %v224, 0.0
    %v227 = vmax.f32 %v225, 0.0
    %v228 = vmin.f32 %v226, 6.0
    %v229 = vmin.f32 %v227, 6.0
    %v230 = vmul.f32 %v228, 0.16666667
    %v231 = vmul.f32 %v229, 0.16666667
    %v232 = vmul.f32 %v218, %v230
    %v233 = vmul.f32 %v220, %v231
    %v236 = vcombine.low %v232, %v233
    %v238 = vunpack.c.l.s4 1966171168
    %v239 = vunpack.c.0.s8 %v238
    %v240 = vlaneseq
    %v241 = vshrl.u32 %v240, 7
    %v242 = vsub.s32 %v239, %v241
    %v243 = vrot.slane %v236, %v242
    %v245 = vunpack.c.l.s4 1966171168
    %v246 = vunpack.c.0.s8 %v245
    %v247 = vlaneseq
    %v248 = vshrl.u32 %v247, 7
    %v249 = vsub.s32 %v246, %v248
    %v250 = vrot.slane %v243, %v249
    %v252 = vlaneseq
    %vm253 = vcmp.ge.s32.totalorder %v252, 0
    %vm254 = vcmp.lt.s32.totalorder %v252, 256
    %vm255 = vmand %vm253, %vm254
    %256 = vst.msk [vmem:[#allocation7] sm:$0x3] %vm255, %v250
    // Predicated region
    $region22: #{tpu_custom_call.1} parent=1 // pred_check
      _
    $region23: #{tpu_custom_call.1} parent=1 // pred_check_branch
      %258 = sbr.rel (0) target = $region25
    $region24: #{tpu_custom_call.1} parent=1 // pred_region
      %s260 = ssub.s32 32, 32
      %261 = vsyncadd [#allocation4], %s260
      %s263 = sshll.u32 [#allocation7], 4
      %s264 = int_to_ptr.vmem [resolvable:$true] %s263
      %266 = dma.vmem_to_hbm [thread:$0]  %s264, 32, %s3, [#allocation4]
    $region25: #{tpu_custom_call.1} parent=1 // pred_fallthru
      _
    // Predicated region
    $region26: #{tpu_custom_call.1} parent=1 // pred_check
      _
    $region27: #{tpu_custom_call.1} parent=1 // pred_check_branch
      %268 = sbr.rel (0) target = $region29
    $region28: #{tpu_custom_call.1} parent=1 // pred_region
      %269 = dma.done [#allocation4], 32
    $region29: #{tpu_custom_call.1} parent=1 // pred_fallthru
      _
    %270 = vsyncpa [#allocation3], 1
    %271 = vsyncpa [#allocation6], 1
    %272 = vsyncpa [#allocation4], 1

</llo_original>
